<compile_context>
chip_gen: v5e
topology: v5e:2x2
jax: 0.10.0
libtpu: 0.0.40
codegen_flags: <defaults>
</compile_context>

<pallas_src>
from functools import partial

import jax
import jax.numpy as jnp
from jax.experimental import pallas as pl
from jax.experimental.pallas import tpu as pltpu

LANES = 128
SUBLANES = 8
MAX_TILE_ROWS = 1024      # 1024 x 128 f32 = 512 KiB/tile; 2 inputs double-buffered = 2 MiB
NUM_CORES = 2             # megacore split on v7x; harmless sequential pass on 1-TC chips


def _round_up(x: int, m: int) -> int:
    return ((x + m - 1) // m) * m


def _mse_partial_kernel(a_ref, b_ref, o_ref, acc_ref, *,
                        total_rows, tile_rows, blocks_per_core):
    """Accumulate per-core partial sums of (a-b)^2 into an (8,128) accumulator."""
    core = pl.program_id(0)
    step = pl.program_id(1)

    @pl.when(step == 0)
    def _init():
        acc_ref[...] = jnp.zeros_like(acc_ref)

    # Logical (unclamped) block position -> global row offset of this tile.
    block_idx = core * blocks_per_core + step
    row_start = block_idx * tile_rows

    d = a_ref[...].astype(jnp.float32) - b_ref[...].astype(jnp.float32)

    # Mask rows past the valid range: covers both the partial tail block and
    # fully out-of-range (clamped/duplicated) blocks on the second core.
    row_ids = row_start + jax.lax.broadcasted_iota(
        jnp.int32, (tile_rows, LANES), 0)
    d = jnp.where(row_ids < total_rows, d, 0.0)

    # Reduce (tile_rows, 128) -> (8, 128) with pure vreg adds (no XLU work);
    # the single cross-lane reduce happens once, outside the kernel.
    part = (d * d).reshape(tile_rows // SUBLANES, SUBLANES, LANES).sum(axis=0)
    acc_ref[...] += part

    @pl.when(step == pl.num_programs(1) - 1)
    def _finalize():
        o_ref[...] = acc_ref[...]


def mse(y_true: jax.Array, y_pred: jax.Array) -> jax.Array:
    """Mean squared error: semantics of torch.mean((y_true - y_pred) ** 2)."""
    assert y_true.shape == y_pred.shape, "shapes must match (no broadcasting in ref)"
    n = y_true.size

    a = y_true.reshape(-1)
    b = y_pred.reshape(-1)

    # Lane-aligned bulk goes through the kernel; the (<128-element) remainder
    # is reduced in plain jnp below (avoids padding/copying the full tensors).
    rows = n // LANES
    n_main = rows * LANES

    total = jnp.float32(0.0)

    if rows > 0:
        tile_rows = min(MAX_TILE_ROWS, _round_up(rows, SUBLANES))
        blocks_total = pl.cdiv(rows, tile_rows)
        blocks_per_core = pl.cdiv(blocks_total, NUM_CORES)

        a2 = a[:n_main].reshape(rows, LANES)
        b2 = b[:n_main].reshape(rows, LANES)

        # Clamp the block index so DMAs never address past the array; the
        # in-kernel row mask zeroes any duplicated/partial data.
        def in_map(c, s):
            return (jnp.minimum(c * blocks_per_core + s, blocks_total - 1), 0)

        kernel = partial(
            _mse_partial_kernel,
            total_rows=rows,
            tile_rows=tile_rows,
            blocks_per_core=blocks_per_core,
        )

        partials = pl.pallas_call(
            kernel,
            out_shape=jax.ShapeDtypeStruct((NUM_CORES * SUBLANES, LANES),
                                           jnp.float32),
            grid_spec=pltpu.PrefetchScalarGridSpec(
                num_scalar_prefetch=0,
                grid=(NUM_CORES, blocks_per_core),
                in_specs=[
                    pl.BlockSpec((tile_rows, LANES), in_map),
                    pl.BlockSpec((tile_rows, LANES), in_map),
                ],
                out_specs=pl.BlockSpec((SUBLANES, LANES), lambda c, s: (c, 0)),
                scratch_shapes=[pltpu.VMEM((SUBLANES, LANES), jnp.float32)],
            ),
            compiler_params=pltpu.CompilerParams(
                dimension_semantics=("parallel", "arbitrary"),
            ),
        )(a2, b2)

        total = total + jnp.sum(partials)

    if n_main < n:
        # Tiny (<128 element) lane remainder: plain jnp, negligible traffic.
        d_tail = a[n_main:].astype(jnp.float32) - b[n_main:].astype(jnp.float32)
        total = total + jnp.sum(d_tail * d_tail)

    return total / jnp.float32(n)


if __name__ == "__main__":
    key = jax.random.PRNGKey(0)

    # Spec-consistent small shape: B=2, C=4, H=W=16 (NCHW).
    k1, k2 = jax.random.split(key)
    shape = (2, 4, 16, 16)
    y_true = jax.random.normal(k1, shape, dtype=jnp.float32)
    y_pred = jax.random.normal(k2, shape, dtype=jnp.float32)

    result = mse(y_true, y_pred)
    jax.block_until_ready(result)
    ref = jnp.mean((y_true - y_pred) ** 2)
    assert jnp.allclose(result, ref, rtol=1e-5, atol=1e-6), (result, ref)

    # Second check exercising multi-block accumulation and the 2-way
    # parallel (megacore) split: rows = 4096 -> grid (2, 2).
    k3, k4 = jax.random.split(k2)
    shape2 = (16, 16, 32, 64)
    y_true2 = jax.random.normal(k3, shape2, dtype=jnp.float32)
    y_pred2 = jax.random.normal(k4, shape2, dtype=jnp.float32)
    result2 = mse(y_true2, y_pred2)
    jax.block_until_ready(result2)
    ref2 = jnp.mean((y_true2 - y_pred2) ** 2)
    assert jnp.allclose(result2, ref2, rtol=1e-5, atol=1e-6), (result2, ref2)

    print("KERNEL_OK")
</pallas_src>

<mosaic_0001>
module attributes {stable_mosaic.version = 11 : i64} {
  func.func @_mse_partial_kernel(%arg0: i32, %arg1: i32, %arg2: memref<16x128xf32, #tpu.memory_space<vmem>>, %arg3: memref<16x128xf32, #tpu.memory_space<vmem>>, %arg4: memref<8x128xf32, #tpu.memory_space<vmem>>, %arg5: memref<8x128xf32, #tpu.memory_space<vmem>>) attributes {dimension_semantics = [#tpu.dimension_semantics<parallel>, #tpu.dimension_semantics<arbitrary>], iteration_bounds = array<i64: 2, 1>, scalar_prefetch = 0 : i64, scratch_operands = 1 : i64, tpu.core_type = #tpu.core_type<tc>, window_params = [{transform_indices = @transform_0, window_bounds = array<i64: 16, 128>}, {transform_indices = @transform_1, window_bounds = array<i64: 16, 128>}, {transform_indices = @transform_2, window_bounds = array<i64: 8, 128>}]} {
    %c0_i32 = arith.constant 0 : i32
    %0 = arith.cmpi eq, %arg1, %c0_i32 : i32
    %1 = arith.extui %0 : i1 to i32
    %c0_i32_0 = arith.constant 0 : i32
    %2 = arith.cmpi ne, %1, %c0_i32_0 : i32
    scf.if %2 {
      %cst_12 = arith.constant 0.000000e+00 : f32
      %25 = vector.broadcast %cst_12 : f32 to vector<8x128xf32>
      %c0_13 = arith.constant 0 : index
      %c0_14 = arith.constant 0 : index
      %26 = vector.load %arg5[%c0_13, %c0_14] : memref<8x128xf32, #tpu.memory_space<vmem>>, vector<8x128xf32>
      tpu.vector_store %arg5[%c0_13, %c0_14], %25 {strides = array<i32>} : memref<8x128xf32, #tpu.memory_space<vmem>>, vector<8x128xf32>,
    } else {
    }
    %c1_i32 = arith.constant 1 : i32
    %3 = arith.muli %arg0, %c1_i32 : i32
    %4 = arith.addi %3, %arg1 : i32
    %c16_i32 = arith.constant 16 : i32
    %5 = arith.muli %4, %c16_i32 : i32
    %c0 = arith.constant 0 : index
    %c0_1 = arith.constant 0 : index
    %6 = vector.load %arg2[%c0, %c0_1] : memref<16x128xf32, #tpu.memory_space<vmem>>, vector<16x128xf32>
    %c0_2 = arith.constant 0 : index
    %c0_3 = arith.constant 0 : index
    %7 = vector.load %arg3[%c0_2, %c0_3] : memref<16x128xf32, #tpu.memory_space<vmem>>, vector<16x128xf32>
    %8 = arith.subf %6, %7 : vector<16x128xf32>
    %9 = tpu.iota {dimensions = array<i32: 0>} : vector<16x128xi32>
    %10 = vector.broadcast %5 : i32 to vector<16x128xi32>
    %11 = arith.addi %10, %9 : vector<16x128xi32>
    %c16_i32_4 = arith.constant 16 : i32
    %12 = vector.broadcast %c16_i32_4 : i32 to vector<16x128xi32>
    %13 = arith.cmpi slt, %11, %12 : vector<16x128xi32>
    %cst = arith.constant 0.000000e+00 : f32
    %14 = vector.broadcast %cst : f32 to vector<16x128xf32>
    %15 = arith.select %13, %8, %14 : vector<16x128xi1>, vector<16x128xf32>
    %16 = arith.mulf %15, %15 : vector<16x128xf32>
    %17 = vector.shape_cast %16 : vector<16x128xf32> to vector<2x8x128xf32>
    %cst_5 = arith.constant dense<0.000000e+00> : vector<8x128xf32>
    %18 = vector.multi_reduction <add>, %17, %cst_5 [0] : vector<2x8x128xf32> to vector<8x128xf32>
    %c0_6 = arith.constant 0 : index
    %c0_7 = arith.constant 0 : index
    %19 = vector.load %arg5[%c0_6, %c0_7] : memref<8x128xf32, #tpu.memory_space<vmem>>, vector<8x128xf32>
    %20 = arith.addf %19, %18 : vector<8x128xf32>
    %c0_8 = arith.constant 0 : index
    %c0_9 = arith.constant 0 : index
    %21 = vector.load %arg5[%c0_8, %c0_9] : memref<8x128xf32, #tpu.memory_space<vmem>>, vector<8x128xf32>
    tpu.vector_store %arg5[%c0_8, %c0_9], %20 {strides = array<i32>} : memref<8x128xf32, #tpu.memory_space<vmem>>, vector<8x128xf32>,
    %c0_i32_10 = arith.constant 0 : i32
    %22 = arith.cmpi eq, %arg1, %c0_i32_10 : i32
    %23 = arith.extui %22 : i1 to i32
    %c0_i32_11 = arith.constant 0 : i32
    %24 = arith.cmpi ne, %23, %c0_i32_11 : i32
    scf.if %24 {
      %c0_12 = arith.constant 0 : index
      %c0_13 = arith.constant 0 : index
      %25 = vector.load %arg5[%c0_12, %c0_13] : memref<8x128xf32, #tpu.memory_space<vmem>>, vector<8x128xf32>
      %c0_14 = arith.constant 0 : index
      %c0_15 = arith.constant 0 : index
      %26 = vector.load %arg4[%c0_14, %c0_15] : memref<8x128xf32, #tpu.memory_space<vmem>>, vector<8x128xf32>
      tpu.vector_store %arg4[%c0_14, %c0_15], %25 {strides = array<i32>} : memref<8x128xf32, #tpu.memory_space<vmem>>, vector<8x128xf32>,
    } else {
    }
    return
  }
  func.func @transform_0(%arg0: i32, %arg1: i32) -> (i32, i32) {
    %c1_i32 = arith.constant 1 : i32
    %0 = arith.muli %arg0, %c1_i32 : i32
    %1 = arith.addi %0, %arg1 : i32
    %c0_i32 = arith.constant 0 : i32
    %2 = arith.minsi %1, %c0_i32 : i32
    %c0_i32_0 = arith.constant 0 : i32
    %c0_i32_1 = arith.constant 0 : i32
    return %2, %c0_i32_0 : i32, i32
  }
  func.func @transform_1(%arg0: i32, %arg1: i32) -> (i32, i32) {
    %c1_i32 = arith.constant 1 : i32
    %0 = arith.muli %arg0, %c1_i32 : i32
    %1 = arith.addi %0, %arg1 : i32
    %c0_i32 = arith.constant 0 : i32
    %2 = arith.minsi %1, %c0_i32 : i32
    %c0_i32_0 = arith.constant 0 : i32
    %c0_i32_1 = arith.constant 0 : i32
    return %2, %c0_i32_0 : i32, i32
  }
  func.func @transform_2(%arg0: i32, %arg1: i32) -> (i32, i32) {
    %c0_i32 = arith.constant 0 : i32
    %c0_i32_0 = arith.constant 0 : i32
    return %arg0, %c0_i32 : i32, i32
  }
}

</mosaic_0001>

<llo_original>
// kernel: tpu_custom_call.1
$region0: #{tpu_custom_call.1}
  #allocation0 [shape = 'u32[]', space=smem, size = 0x4, offset = 0x4, fixed_abs, tag = 'smem constant byte address 0x4 - core index']
  #allocation1 [shape = 'u32[72,128]{1,0:T(1,128)}', space=vmem, size = 0x9000, scoped, tag = 'internal scratch']
  #allocation2 [shape = 'f32[8,128]{1,0:T(8,128)}', space=vmem, size = 0x1000, scoped, tag = 'scratch operand']
  %s0 = inlined_call_operand.hbm [shape: f32[16,128], index: 0, kind: input, shape index: {}]
  %s1 = inlined_call_operand.hbm [shape: f32[16,128], index: 1, kind: input, shape index: {}]
  %s2 = inlined_call_operand.hbm [shape: f32[16,128], index: 2, kind: output, shape index: {}]
  %s3 = sld [smem:[#allocation0]]
  $region57: #{tpu_custom_call.1} parent=0
    _
  %s5 = ssub.s32 1, %s3
  %s6 = scalar_select 0, %s5, %s3
  $region1: #{tpu_custom_call.1} parent=0
    #allocation3 [shape = 'u8[16384]{0}', space=vmem, size = 0x4000, scoped, tag = 'input window, operand 0']
    #allocation4 [shape = 's32[2]{0}', space=sflag, size = 0x8, scoped, tag = 'scoped memory for tpu_custom_call.1']
    #allocation5 [shape = 's32[2]{0}', space=sflag, size = 0x8, scoped, tag = 'scoped memory for tpu_custom_call.1']
    #allocation6 [shape = 'u8[16384]{0}', space=vmem, size = 0x4000, scoped, tag = 'input window, operand 1']
    #allocation7 [shape = 's32[2]{0}', space=sflag, size = 0x8, scoped, tag = 'scoped memory for tpu_custom_call.1']
    #allocation8 [shape = 'u8[8192]{0}', space=vmem, size = 0x2000, scoped, tag = 'output window, operand 0']
    %7 = vsyncpa [#allocation4], 0
    %s8 = scalar_lea.sflag [#allocation4], 1
    %9 = vsyncpa %s8, 0
    %10 = vsyncpa [#allocation7], 0
    %s11 = scalar_lea.sflag [#allocation7], 1
    %12 = vsyncpa %s11, 0
    %13 = vsyncpa [#allocation5], 0
    %s14 = scalar_lea.sflag [#allocation5], 1
    %15 = vsyncpa %s14, 0
    loop: start=0, step=1, limit=4
    $region2: #{tpu_custom_call.1} parent=1 // loop_pre_header
      _
    $region3: #{tpu_custom_call.1} parent=1 // loop_header
      %s17 = sphi 0, %s21
      %p18 = scmp.ge.s32.totalorder %s17, 4
      %s24 = sphi 0, %s36
      %s25 = sphi 0, %s32
      %s26 = sphi 0, %s24
      %s27 = sphi 0, %s25
      %s28 = sphi 0, %s26
      %s29 = sphi 0, %s27
      %s45 = sphi 0, %s47
      %s48 = sphi 0, %s45
      %s49 = sphi 0, %s48
      %s65 = sphi 0, %s49
      %s77 = sphi 0, %s79
      %s80 = sphi 0, %s77
      %s81 = sphi 0, %s80
      %s97 = sphi 0, %s81
      %s103 = sphi 0, %s105
      %s106 = sphi 0, %s103
      %s107 = sphi 0, %s106
      %s123 = sphi 0, %s107
    $region4: #{tpu_custom_call.1} parent=1 // loop_header_branch
      %20 = sbr.rel (%p18) target = $region8
    $region5: #{tpu_custom_call.1} parent=1 // loop_body
      %s22 = ssub.s32 %s17, 1
      %s23 = ssub.s32 %s17, 2
      %s30 = sadd.s32 1, %s25
      %p31 = scmp.ge.s32.totalorder %s30, 1
      %s32 = scalar_select %p31, 0, %s30
      %s33 = sadd.s32 1, %s24
      %s34 = scalar_select %p31, %s33, %s24
      %p35 = scmp.ge.s32.totalorder %s34, 2
      %s36 = scalar_select %p35, 0, %s34
      %s37 = sadd.s32 %s24, %s25
      %p38 = scmp.lt.s32.totalorder %s37, 0
      %s39 = scalar_select %p38, %s37, 0
      %s40 = sadd.s32 %s36, %s32
      %p41 = scmp.lt.s32.totalorder %s40, 0
      %s42 = scalar_select %p41, %s40, 0
      %s43 = ssub.s32 %s39, %s42
      %p44 = scmp.eq.s32.totalorder %s43, 0
      %s46 = sadd.s32 %s45, 1
      %s47 = scalar_select %p44, %s45, %s46
      %p50 = pneg %p44
      %p51 = scmp.eq.s32.totalorder %s17, 1
      %p52 = por %p50, %p51
      %p53 = scmp.ne.s32.totalorder %s45, %s48
      %p54 = scmp.eq.s32.totalorder %s17, 0
      %p55 = por %p53, %p54
      %p56 = scmp.ne.s32.totalorder %s45, %s48
      %p57 = scmp.eq.s32.totalorder %s22, 1
      %p58 = por %p56, %p57
      %p59 = scmp.ne.s32.totalorder %s48, %s49
      %p60 = scmp.eq.s32.totalorder %s22, 0
      %p61 = por %p59, %p60
      %p62 = scmp.ne.s32.totalorder %s48, %s49
      %p63 = scmp.eq.s32.totalorder %s23, 1
      %p64 = por %p62, %p63
      %p66 = scmp.ne.s32.totalorder %s49, %s65
      %p67 = scmp.eq.s32.totalorder %s23, 0
      %p68 = por %p66, %p67
      %s69 = sadd.s32 %s24, %s25
      %p70 = scmp.lt.s32.totalorder %s69, 0
      %s71 = scalar_select %p70, %s69, 0
      %s72 = sadd.s32 %s36, %s32
      %p73 = scmp.lt.s32.totalorder %s72, 0
      %s74 = scalar_select %p73, %s72, 0
      %s75 = ssub.s32 %s71, %s74
      %p76 = scmp.eq.s32.totalorder %s75, 0
      %s78 = sadd.s32 %s77, 1
      %s79 = scalar_select %p76, %s77, %s78
      %p82 = pneg %p76
      %p83 = scmp.eq.s32.totalorder %s17, 1
      %p84 = por %p82, %p83
      %p85 = scmp.ne.s32.totalorder %s77, %s80
      %p86 = scmp.eq.s32.totalorder %s17, 0
      %p87 = por %p85, %p86
      %p88 = scmp.ne.s32.totalorder %s77, %s80
      %p89 = scmp.eq.s32.totalorder %s22, 1
      %p90 = por %p88, %p89
      %p91 = scmp.ne.s32.totalorder %s80, %s81
      %p92 = scmp.eq.s32.totalorder %s22, 0
      %p93 = por %p91, %p92
      %p94 = scmp.ne.s32.totalorder %s80, %s81
      %p95 = scmp.eq.s32.totalorder %s23, 1
      %p96 = por %p94, %p95
      %p98 = scmp.ne.s32.totalorder %s81, %s97
      %p99 = scmp.eq.s32.totalorder %s23, 0
      %p100 = por %p98, %p99
      %s101 = ssub.s32 %s24, %s36
      %p102 = scmp.eq.s32.totalorder %s101, 0
      %s104 = sadd.s32 %s103, 1
      %s105 = scalar_select %p102, %s103, %s104
      %p108 = pneg %p102
      %p109 = scmp.eq.s32.totalorder %s17, 1
      %p110 = por %p108, %p109
      %p111 = scmp.ne.s32.totalorder %s103, %s106
      %p112 = scmp.eq.s32.totalorder %s17, 0
      %p113 = por %p111, %p112
      %p114 = scmp.ne.s32.totalorder %s103, %s106
      %p115 = scmp.eq.s32.totalorder %s22, 1
      %p116 = por %p114, %p115
      %p117 = scmp.ne.s32.totalorder %s106, %s107
      %p118 = scmp.eq.s32.totalorder %s22, 0
      %p119 = por %p117, %p118
      %p120 = scmp.ne.s32.totalorder %s106, %s107
      %p121 = scmp.eq.s32.totalorder %s23, 1
      %p122 = por %p120, %p121
      %p124 = scmp.ne.s32.totalorder %s107, %s123
      %p125 = scmp.eq.s32.totalorder %s23, 0
      %p126 = por %p124, %p125
      %p127 = scmp.le.s32.totalorder 1, %s17
      %p128 = scmp.lt.s32.totalorder %s17, 3
      %p129 = pnand %p127, %p128
      %p130 = pneg %p129
      // Predicated region
      $region9: #{tpu_custom_call.1} parent=5 // pred_check
        _
      $region10: #{tpu_custom_call.1} parent=5 // pred_check_branch
        %132 = sbr.rel (%p129) target = $region12
      $region11: #{tpu_custom_call.1} parent=5 // pred_region
        %s133 = ssub.s32 %s17, 1
      $region12: #{tpu_custom_call.1} parent=5 // pred_fallthru
        _
      %p134 = scmp.lt.s32.totalorder %s17, 2
      // Predicated region
      $region13: #{tpu_custom_call.1} parent=5 // pred_check
        %p135 = pneg %p134
      $region14: #{tpu_custom_call.1} parent=5 // pred_check_branch
        %137 = sbr.rel (%p135) target = $region16
      $region15: #{tpu_custom_call.1} parent=5 // pred_region
        // Predicated region
        $region17: #{tpu_custom_call.1} parent=15 // pred_check
          %p138 = pneg %p55
        $region18: #{tpu_custom_call.1} parent=15 // pred_check_branch
          %140 = sbr.rel (%p138) target = $region20
        $region19: #{tpu_custom_call.1} parent=15 // pred_region
          %s141 = sand.u32 %s45, 1
          %s142 = scalar_lea.sflag [#allocation4], %s141
          %s143 = sand.u32 %s45, 1
          %s144 = smul.addr %s143, 16
          %s145 = scalar_lea.vmem [#allocation3], %s144
          %s146 = sadd.s32 %s24, %s25
          %p147 = scmp.lt.s32.totalorder %s146, 0
          %s148 = scalar_select %p147, %s146, 0
          %s149 = smul.u32 2, %s148
          %151 = vsyncadd %s142, 0
          %s152 = smul.addr %s149, 8
          %s153 = scalar_lea.hbm %s0, %s152
          %s154 = sshll.u32 %s153, 4
          %s155 = int_to_ptr.hbm [resolvable:$true] %s154
          %s156 = sshll.u32 %s145, 4
          %s157 = int_to_ptr.vmem [resolvable:$true] %s156
          %162 = dma.hbm_to_vmem [thread:$0]  %s155, 256, %s157, %s142, 128, 128, 8
        $region20: #{tpu_custom_call.1} parent=15 // pred_fallthru
          _
        // Predicated region
        $region21: #{tpu_custom_call.1} parent=15 // pred_check
          %p163 = pneg %p87
        $region22: #{tpu_custom_call.1} parent=15 // pred_check_branch
          %165 = sbr.rel (%p163) target = $region24
        $region23: #{tpu_custom_call.1} parent=15 // pred_region
          %s166 = sand.u32 %s77, 1
          %s167 = scalar_lea.sflag [#allocation7], %s166
          %s168 = sand.u32 %s77, 1
          %s169 = smul.addr %s168, 16
          %s170 = scalar_lea.vmem [#allocation6], %s169
          %s171 = sadd.s32 %s24, %s25
          %p172 = scmp.lt.s32.totalorder %s171, 0
          %s173 = scalar_select %p172, %s171, 0
          %s174 = smul.u32 2, %s173
          %176 = vsyncadd %s167, 0
          %s177 = smul.addr %s174, 8
          %s178 = scalar_lea.hbm %s1, %s177
          %s179 = sshll.u32 %s178, 4
          %s180 = int_to_ptr.hbm [resolvable:$true] %s179
          %s181 = sshll.u32 %s170, 4
          %s182 = int_to_ptr.vmem [resolvable:$true] %s181
          %187 = dma.hbm_to_vmem [thread:$0]  %s180, 256, %s182, %s167, 128, 128, 8
        $region24: #{tpu_custom_call.1} parent=15 // pred_fallthru
          _
      $region16: #{tpu_custom_call.1} parent=5 // pred_fallthru
        _
      %p188 = scmp.le.s32.totalorder 1, %s17
      %p189 = scmp.lt.s32.totalorder %s17, 3
      %p190 = pnand %p188, %p189
      %p191 = pneg %p190
      // Predicated region
      $region25: #{tpu_custom_call.1} parent=5 // pred_check
        _
      $region26: #{tpu_custom_call.1} parent=5 // pred_check_branch
        %193 = sbr.rel (%p190) target = $region28
      $region27: #{tpu_custom_call.1} parent=5 // pred_region
        %s194 = ssub.s32 %s17, 1
        %s195 = sand.u32 %s48, 1
        %s196 = scalar_lea.sflag [#allocation4], %s195
        %s197 = sand.u32 %s48, 1
        %s198 = smul.addr %s197, 16
        %s199 = scalar_lea.vmem [#allocation3], %s198
        // Predicated region
        $region29: #{tpu_custom_call.1} parent=27 // pred_check
          %p200 = pneg %p61
        $region30: #{tpu_custom_call.1} parent=27 // pred_check_branch
          %202 = sbr.rel (%p200) target = $region32
        $region31: #{tpu_custom_call.1} parent=27 // pred_region
          %204 = dma.done %s196, 256
        $region32: #{tpu_custom_call.1} parent=27 // pred_fallthru
          _
        %s205 = sand.u32 %s80, 1
        %s206 = scalar_lea.sflag [#allocation7], %s205
        %s207 = sand.u32 %s80, 1
        %s208 = smul.addr %s207, 16
        %s209 = scalar_lea.vmem [#allocation6], %s208
        // Predicated region
        $region33: #{tpu_custom_call.1} parent=27 // pred_check
          %p210 = pneg %p93
        $region34: #{tpu_custom_call.1} parent=27 // pred_check_branch
          %212 = sbr.rel (%p210) target = $region36
        $region35: #{tpu_custom_call.1} parent=27 // pred_region
          %214 = dma.done %s206, 256
        $region36: #{tpu_custom_call.1} parent=27 // pred_fallthru
          _
        %s215 = sand.u32 %s48, 1
        %s216 = scalar_lea.sflag [#allocation4], %s215
        %s217 = sand.u32 %s48, 1
        %s218 = smul.addr %s217, 16
        %s219 = scalar_lea.vmem [#allocation3], %s218
        %p220 = pneg %p61
        %p221 = pneg %p58
        %s222 = sand.u32 %s80, 1
        %s223 = scalar_lea.sflag [#allocation7], %s222
        %s224 = sand.u32 %s80, 1
        %s225 = smul.addr %s224, 16
        %s226 = scalar_lea.vmem [#allocation6], %s225
        %p227 = pneg %p93
        %p228 = pneg %p90
        %p229 = pneg %p119
        %p230 = pneg %p116
        %s231 = sand.u32 %s106, 1
        %s232 = scalar_lea.sflag [#allocation5], %s231
        %s233 = sand.u32 %s106, 1
        %s234 = smul.addr %s233, 8
        %s235 = scalar_lea.vmem [#allocation8], %s234
        %s236 = sadd.s32 %s26, %s27
        %p237 = scmp.lt.s32.totalorder %s236, 0
        %s238 = scalar_select %p237, %s236, 0
        %s239 = smul.u32 2, %s238
        %s240 = sadd.s32 %s26, %s27
        %p241 = scmp.lt.s32.totalorder %s240, 0
        %s242 = scalar_select %p241, %s240, 0
        %s243 = smul.u32 2, %s242
        %p244 = scmp.eq.s32.totalorder %s27, 0
        // Predicated region
        $region37: #{tpu_custom_call.1} parent=27 // pred_check
          %p245 = pneg %p244
        $region38: #{tpu_custom_call.1} parent=27 // pred_check_branch
          %247 = sbr.rel (%p245) target = $region40
        $region39: #{tpu_custom_call.1} parent=27 // pred_region
          %248 = vst [vmem:[#allocation2] sm:$0xff] 0.0
        $region40: #{tpu_custom_call.1} parent=27 // pred_fallthru
          _
        %s249 = sadd.s32 %s26, %s27
        %s250 = smul.u32 %s249, 16
        %v251 = vld [vmem:[%s199] sm:$0xff]
        %v252 = vld [vmem:[%s199 + $0x8] sm:$0xff]
        %v253 = vld [vmem:[%s209] sm:$0xff]
        %v254 = vld [vmem:[%s209 + $0x8] sm:$0xff]
        %v255 = vsub.f32 %v251, %v253
        %v256 = vsub.f32 %v252, %v254
        %v257 = vlaneseq
        %v258 = vshrl.u32 %v257, 7
        %v259 = vadd.s32 %v258, 8
        %v260 = vstv %s250
        %v261 = vadd.s32 %v260, %v258
        %v262 = vadd.s32 %v260, %v259
        %vm263 = vcmp.lt.s32.totalorder %v261, 16
        %vm264 = vcmp.lt.s32.totalorder %v262, 16
        %v265 = vsel %vm263, %v255, 0.0
        %v266 = vsel %vm264, %v256, 0.0
        %v267 = vmul.f32 %v265, %v265
        %v268 = vmul.f32 %v266, %v266
        %v269 = vadd.f32 %v267, %v268
        %v270 = vld [vmem:[#allocation2] sm:$0xff]
        %v271 = vadd.f32 %v270, %v269
        %272 = vst [vmem:[#allocation2] sm:$0xff] %v271
        // Predicated region
        $region41: #{tpu_custom_call.1} parent=27 // pred_check
          %p273 = pneg %p244
        $region42: #{tpu_custom_call.1} parent=27 // pred_check_branch
          %275 = sbr.rel (%p273) target = $region44
        $region43: #{tpu_custom_call.1} parent=27 // pred_region
          %v276 = vld [vmem:[#allocation2] sm:$0xff]
          %277 = vst [vmem:[%s235] sm:$0xff] %v276
        $region44: #{tpu_custom_call.1} parent=27 // pred_fallthru
          _
        %s278 = sand.u32 %s106, 1
        %s279 = scalar_lea.sflag [#allocation5], %s278
        %s280 = sand.u32 %s106, 1
        %s281 = smul.addr %s280, 8
        %s282 = scalar_lea.vmem [#allocation8], %s281
        // Predicated region
        $region45: #{tpu_custom_call.1} parent=27 // pred_check
          %p283 = pneg %p116
        $region46: #{tpu_custom_call.1} parent=27 // pred_check_branch
          %285 = sbr.rel (%p283) target = $region48
        $region47: #{tpu_custom_call.1} parent=27 // pred_region
          %287 = vsyncadd %s279, 0
          %s288 = smul.addr %s26, 8
          %s289 = scalar_lea.hbm %s2, %s288
          %s291 = sshll.u32 %s282, 4
          %s292 = int_to_ptr.vmem [resolvable:$true] %s291
          %s293 = sshll.u32 %s289, 4
          %s294 = int_to_ptr.hbm [resolvable:$true] %s293
          %296 = dma.vmem_to_hbm [thread:$0]  %s292, 128, %s294, %s279
        $region48: #{tpu_custom_call.1} parent=27 // pred_fallthru
          _
      $region28: #{tpu_custom_call.1} parent=5 // pred_fallthru
        _
      %p297 = scmp.le.s32.totalorder 2, %s17
      // Predicated region
      $region49: #{tpu_custom_call.1} parent=5 // pred_check
        %p298 = pneg %p297
      $region50: #{tpu_custom_call.1} parent=5 // pred_check_branch
        %300 = sbr.rel (%p298) target = $region52
      $region51: #{tpu_custom_call.1} parent=5 // pred_region
        %s301 = ssub.s32 %s17, 2
        // Predicated region
        $region53: #{tpu_custom_call.1} parent=51 // pred_check
          %p302 = pneg %p122
        $region54: #{tpu_custom_call.1} parent=51 // pred_check_branch
          %304 = sbr.rel (%p302) target = $region56
        $region55: #{tpu_custom_call.1} parent=51 // pred_region
          %s305 = sand.u32 %s107, 1
          %s306 = scalar_lea.sflag [#allocation5], %s305
          %s307 = sand.u32 %s107, 1
          %s308 = smul.addr %s307, 8
          %s309 = scalar_lea.vmem [#allocation8], %s308
          %311 = dma.done %s306, 128
        $region56: #{tpu_custom_call.1} parent=51 // pred_fallthru
          _
      $region52: #{tpu_custom_call.1} parent=5 // pred_fallthru
        _
    $region6: #{tpu_custom_call.1} parent=1 // loop_footer
      %s21 = sadd.s32 1, %s17
    $region7: #{tpu_custom_call.1} parent=1 // loop_footer_branch
      %16 = sbr.rel target = $region3
    $region8: #{tpu_custom_call.1} parent=1 // loop_exit
      _
    %312 = vsyncpa [#allocation4], 1
    %s313 = scalar_lea.sflag [#allocation4], 1
    %314 = vsyncpa %s313, 1
    %315 = vsyncpa [#allocation7], 1
    %s316 = scalar_lea.sflag [#allocation7], 1
    %317 = vsyncpa %s316, 1
    %318 = vsyncpa [#allocation5], 1
    %s319 = scalar_lea.sflag [#allocation5], 1
    %320 = vsyncpa %s319, 1

</llo_original>
